<compile_context>
chip_gen: v7x
topology: tpu7x:2x2x1
jax: 0.10.0
libtpu: 0.0.40
codegen_flags: <defaults>
</compile_context>

<pallas_src>
import functools

import jax
import jax.numpy as jnp
from jax import lax
from jax.experimental import pallas as pl
from jax.experimental.pallas import tpu as pltpu


_MASK_VALUE = -1e30  # finite "minus infinity": keeps all arithmetic NaN-free


def _simclr_kernel(anchor_ref, contrast_ref, pos_ref, out_ref, m_ref, l_ref,
                   *, n_valid_cols):
    """One (row_tile i, contrast_tile k) step of the online-softmax SimCLR loss.

    anchor_ref   : [tr, dim] bf16 -- L2-normalized anchor rows * (1/T)
    contrast_ref : [tc, dim] bf16 -- L2-normalized contrast rows (both views)
    pos_ref      : [tr, 1]   f32  -- positive-pair logit (1/T) * <v0, v1>
    out_ref      : [tr, 1]   f32  -- per-row log-prob of the positive pair
    m_ref, l_ref : [tr, 1]   f32  -- running row max / exp-sum (VMEM scratch)
    """
    i = pl.program_id(0)
    k = pl.program_id(1)
    tr = anchor_ref.shape[0]
    tc = contrast_ref.shape[0]

    @pl.when(k == 0)
    def _init():
        m_ref[...] = jnp.full((tr, 1), _MASK_VALUE, jnp.float32)
        l_ref[...] = jnp.zeros((tr, 1), jnp.float32)

    # Single NT matmul on the MXU, f32 accumulation.
    d = lax.dot_general(anchor_ref[...], contrast_ref[...],
                        dimension_numbers=(((1,), (1,)), ((), ())),
                        preferred_element_type=jnp.float32)        # [tr, tc]

    # Exact masking (VPU): (a) self-similarity diagonal of the [b, 2b] logit
    # matrix, (b) zero-padded contrast columns beyond the true 2b.
    row_g = i * tr + lax.broadcasted_iota(jnp.int32, (tr, tc), 0)
    col_g = k * tc + lax.broadcasted_iota(jnp.int32, (tr, tc), 1)
    invalid = (row_g == col_g) | (col_g >= n_valid_cols)
    d = jnp.where(invalid, _MASK_VALUE, d)

    # Online log-sum-exp over the contrast axis (carried across k in scratch).
    m_prev = m_ref[...]
    m_new = jnp.maximum(m_prev, jnp.max(d, axis=-1, keepdims=True))
    l_ref[...] = (jnp.exp(m_prev - m_new) * l_ref[...]
                  + jnp.sum(jnp.exp(d - m_new), axis=-1, keepdims=True))
    m_ref[...] = m_new

    @pl.when(k == pl.num_programs(1) - 1)
    def _finalize():
        out_ref[...] = pos_ref[...] - (m_ref[...] + jnp.log(l_ref[...]))


def _round_up(x, m):
    return ((x + m - 1) // m) * m


def _split_axis(n, block_target, min_tiles=1):
    """Pick (tile, n_tiles) with tile a multiple of 8 and n_tiles tiles."""
    n_tiles = max(min_tiles, -(-n // block_target))
    tile = _round_up(-(-n // n_tiles), 8)
    return tile, n_tiles


def simclr_loss(features, temperature, *, block_rows=256, block_cols=256,
                max_resident_cols=2048):
    """features: [b, 2, dim] -> scalar SimCLR loss (f32). Matches SimCLRLoss."""
    b, n, dim = features.shape
    assert n == 2
    inv_t = 1.0 / float(temperature)

    # ---- tiny O(b*dim) f32 prologue (plain XLA): normalize once, cast bf16 ----
    feats = features.astype(jnp.float32)
    norm = jnp.sqrt(jnp.sum(feats * feats, axis=-1, keepdims=True))
    feats = feats / jnp.maximum(norm, 1e-12)            # F.normalize(dim=-1)
    v0, v1 = feats[:, 0], feats[:, 1]
    # Positive logit in exact f32 (the same pair enters the denominator via
    # the bf16 matmul -- tiny, documented inconsistency vs. the reference).
    pos = inv_t * jnp.sum(v0 * v1, axis=-1, keepdims=True)            # [b, 1]
    anchor = (v0 * inv_t).astype(jnp.bfloat16)                        # [b, dim]
    contrast = jnp.concatenate([v0, v1], axis=0).astype(jnp.bfloat16)  # [2b,dim]

    # ---- tile selection (+ zero padding; padded rows/cols masked in-kernel) --
    nc = 2 * b
    # Keep >= 2 row tiles when possible so the "parallel" axis can shard
    # across both TensorCores on v7x (free whenever the contrast is resident).
    tr, n_row_tiles = _split_axis(b, block_rows, min_tiles=2 if b >= 16 else 1)
    if nc <= max_resident_cols:
        # Single full-extent contrast tile -> constant block index -> the
        # whole bf16 contrast is DMA'd from HBM exactly once for the grid.
        tc, n_col_tiles = _round_up(nc, 8), 1
    else:
        tc, n_col_tiles = _split_axis(nc, block_cols)
    b_pad = tr * n_row_tiles
    nc_pad = tc * n_col_tiles

    if b_pad != b:
        anchor = jnp.pad(anchor, ((0, b_pad - b), (0, 0)))
        pos = jnp.pad(pos, ((0, b_pad - b), (0, 0)))
    if nc_pad != nc:
        contrast = jnp.pad(contrast, ((0, nc_pad - nc), (0, 0)))

    kernel = functools.partial(_simclr_kernel, n_valid_cols=nc)

    log_prob_pos = pl.pallas_call(
        kernel,
        out_shape=jax.ShapeDtypeStruct((b_pad, 1), jnp.float32),
        grid_spec=pltpu.PrefetchScalarGridSpec(
            num_scalar_prefetch=0,
            grid=(n_row_tiles, n_col_tiles),
            in_specs=[
                pl.BlockSpec((tr, dim), lambda i, k: (i, 0)),   # anchor rows
                pl.BlockSpec((tc, dim), lambda i, k: (k, 0)),   # contrast rows
                pl.BlockSpec((tr, 1), lambda i, k: (i, 0)),     # positive logit
            ],
            out_specs=pl.BlockSpec((tr, 1), lambda i, k: (i, 0)),
            scratch_shapes=[
                pltpu.VMEM((tr, 1), jnp.float32),   # running row max
                pltpu.VMEM((tr, 1), jnp.float32),   # running exp-sum
            ],
        ),
        compiler_params=pltpu.CompilerParams(
            dimension_semantics=("parallel", "arbitrary"),
            # Resident-contrast path is capped (max_resident_cols), so the
            # footprint stays well under 32 MiB: safe on v7x's 64 MiB physical
            # VMEM and above v5e's 16 MiB default scoped limit.
            vmem_limit_bytes=32 * 1024 * 1024,
        ),
    )(anchor, contrast, pos)

    # O(b) epilogue (XLA): mean over the (single) positive per row + bias.
    return -jnp.mean(log_prob_pos[:b, 0]) + 1e-6


def simclr_loss_ref(features, temperature):
    """Pure-JAX f32 reference mirroring the PyTorch module line-by-line."""
    b, n, dim = features.shape
    feats = features.astype(jnp.float32)
    feats = feats / jnp.maximum(
        jnp.linalg.norm(feats, axis=2, keepdims=True), 1e-12)
    contrast = jnp.concatenate([feats[:, 0], feats[:, 1]], axis=0)   # [2b, dim]
    anchor = feats[:, 0]
    dot = (anchor @ contrast.T) / temperature
    logits = dot - jnp.max(dot, axis=1, keepdims=True)
    mask = jnp.tile(jnp.eye(b, dtype=jnp.float32), (1, 2))
    logits_mask = jnp.ones_like(mask).at[jnp.arange(b), jnp.arange(b)].set(0.0)
    mask = mask * logits_mask
    exp_logits = jnp.exp(logits) * logits_mask
    log_prob = logits - jnp.log(jnp.sum(exp_logits, axis=1, keepdims=True))
    return -jnp.mean(jnp.sum(mask * log_prob, axis=1) / jnp.sum(mask, axis=1)) + 1e-6


if __name__ == "__main__":
    temperature = 0.5
    k1, k2, k3 = jax.random.split(jax.random.PRNGKey(0), 3)

    # Case 1: forced multi-tile grid (2 row tiles x 3 contrast tiles, padded
    # columns) -> exercises the online-LSE carry, diagonal masking across
    # tile boundaries, and the column-padding mask.
    b1, d1 = 64, 128
    f1 = jax.random.normal(k1, (b1, 2, d1), jnp.float32)
    out1 = jax.block_until_ready(
        simclr_loss(f1, temperature, block_rows=32, block_cols=48,
                    max_resident_cols=0))
    ref1 = jax.block_until_ready(simclr_loss_ref(f1, temperature))
    assert jnp.allclose(out1, ref1, rtol=2e-2, atol=2e-2), (out1, ref1)

    # Case 2: awkward shapes (b, dim not multiples of 8/128) -> row padding,
    # non-aligned feature dim, resident single contrast tile.
    b2, d2 = 20, 40
    f2 = jax.random.normal(k2, (b2, 2, d2), jnp.float32)
    out2 = jax.block_until_ready(simclr_loss(f2, temperature))
    ref2 = jax.block_until_ready(simclr_loss_ref(f2, temperature))
    assert jnp.allclose(out2, ref2, rtol=2e-2, atol=2e-2), (out2, ref2)

    # Case 3: defaults -> VMEM-resident bf16 contrast (fetched once), two
    # parallel row tiles.
    b3, d3 = 256, 128
    f3 = jax.random.normal(k3, (b3, 2, d3), jnp.float32)
    out3 = jax.block_until_ready(simclr_loss(f3, temperature))
    ref3 = jax.block_until_ready(simclr_loss_ref(f3, temperature))
    assert jnp.allclose(out3, ref3, rtol=2e-2, atol=2e-2), (out3, ref3)

    print("KERNEL_OK")
</pallas_src>

<mosaic_0001>
module attributes {stable_mosaic.version = 11 : i64} {
  func.func @_simclr_kernel(%arg0: i32, %arg1: i32, %arg2: memref<32x128xbf16, #tpu.memory_space<vmem>>, %arg3: memref<48x128xbf16, #tpu.memory_space<vmem>>, %arg4: memref<32x1xf32, #tpu.memory_space<vmem>>, %arg5: memref<32x1xf32, #tpu.memory_space<vmem>>, %arg6: memref<32x1xf32, #tpu.memory_space<vmem>>, %arg7: memref<32x1xf32, #tpu.memory_space<vmem>>) attributes {dimension_semantics = [#tpu.dimension_semantics<parallel>, #tpu.dimension_semantics<arbitrary>], iteration_bounds = array<i64: 2, 3>, scalar_prefetch = 0 : i64, scratch_operands = 2 : i64, tpu.core_type = #tpu.core_type<tc>, window_params = [{transform_indices = @transform_0, window_bounds = array<i64: 32, 128>}, {transform_indices = @transform_1, window_bounds = array<i64: 48, 128>}, {transform_indices = @transform_2, window_bounds = array<i64: 32, 1>}, {transform_indices = @transform_3, window_bounds = array<i64: 32, 1>}]} {
    %c0_i32 = arith.constant 0 : i32
    %0 = arith.cmpi eq, %arg1, %c0_i32 : i32
    %1 = arith.extui %0 : i1 to i32
    %c0_i32_0 = arith.constant 0 : i32
    %2 = arith.cmpi ne, %1, %c0_i32_0 : i32
    scf.if %2 {
      %cst_16 = arith.constant -1.000000e+30 : f32
      %39 = vector.broadcast %cst_16 : f32 to vector<32x1xf32>
      %c0_17 = arith.constant 0 : index
      %c0_18 = arith.constant 0 : index
      %40 = vector.load %arg6[%c0_17, %c0_18] : memref<32x1xf32, #tpu.memory_space<vmem>>, vector<32x1xf32>
      tpu.vector_store %arg6[%c0_17, %c0_18], %39 {strides = array<i32>} : memref<32x1xf32, #tpu.memory_space<vmem>>, vector<32x1xf32>,
      %cst_19 = arith.constant 0.000000e+00 : f32
      %41 = vector.broadcast %cst_19 : f32 to vector<32x1xf32>
      %c0_20 = arith.constant 0 : index
      %c0_21 = arith.constant 0 : index
      %42 = vector.load %arg7[%c0_20, %c0_21] : memref<32x1xf32, #tpu.memory_space<vmem>>, vector<32x1xf32>
      tpu.vector_store %arg7[%c0_20, %c0_21], %41 {strides = array<i32>} : memref<32x1xf32, #tpu.memory_space<vmem>>, vector<32x1xf32>,
    } else {
    }
    %c0 = arith.constant 0 : index
    %c0_1 = arith.constant 0 : index
    %3 = vector.load %arg2[%c0, %c0_1] : memref<32x128xbf16, #tpu.memory_space<vmem>>, vector<32x128xbf16>
    %c0_2 = arith.constant 0 : index
    %c0_3 = arith.constant 0 : index
    %4 = vector.load %arg3[%c0_2, %c0_3] : memref<48x128xbf16, #tpu.memory_space<vmem>>, vector<48x128xbf16>
    %cst = arith.constant dense<0.000000e+00> : vector<32x48xf32>
    %5 = tpu.matmul %3, %4, %cst {dimension_numbers = #tpu.dot_dimension_numbers<[1], [1], [0], [0], [0, 0, 1, 0], [], []>} : vector<32x128xbf16>, vector<48x128xbf16>, vector<32x48xf32> -> vector<32x48xf32>
    %c32_i32 = arith.constant 32 : i32
    %6 = arith.muli %arg0, %c32_i32 : i32
    %7 = tpu.iota {dimensions = array<i32: 0>} : vector<32x48xi32>
    %8 = vector.broadcast %6 : i32 to vector<32x48xi32>
    %9 = arith.addi %8, %7 : vector<32x48xi32>
    %c48_i32 = arith.constant 48 : i32
    %10 = arith.muli %arg1, %c48_i32 : i32
    %11 = tpu.iota {dimensions = array<i32: 1>} : vector<32x48xi32>
    %12 = vector.broadcast %10 : i32 to vector<32x48xi32>
    %13 = arith.addi %12, %11 : vector<32x48xi32>
    %14 = arith.cmpi eq, %9, %13 : vector<32x48xi32>
    %c128_i32 = arith.constant 128 : i32
    %15 = vector.broadcast %c128_i32 : i32 to vector<32x48xi32>
    %16 = arith.cmpi sge, %13, %15 : vector<32x48xi32>
    %17 = arith.ori %14, %16 : vector<32x48xi1>
    %cst_4 = arith.constant -1.000000e+30 : f32
    %18 = vector.broadcast %cst_4 : f32 to vector<32x48xf32>
    %19 = arith.select %17, %18, %5 : vector<32x48xi1>, vector<32x48xf32>
    %c0_5 = arith.constant 0 : index
    %c0_6 = arith.constant 0 : index
    %20 = vector.load %arg6[%c0_5, %c0_6] : memref<32x1xf32, #tpu.memory_space<vmem>>, vector<32x1xf32>
    %cst_7 = arith.constant dense<0xFF800000> : vector<32xf32>
    %21 = vector.multi_reduction <maximumf>, %19, %cst_7 [1] : vector<32x48xf32> to vector<32xf32>
    %22 = vector.shape_cast %21 : vector<32xf32> to vector<32x1xf32>
    %23 = arith.maximumf %20, %22 : vector<32x1xf32>
    %24 = arith.subf %20, %23 : vector<32x1xf32>
    %25 = math.exp %24 : vector<32x1xf32>
    %c0_8 = arith.constant 0 : index
    %c0_9 = arith.constant 0 : index
    %26 = vector.load %arg7[%c0_8, %c0_9] : memref<32x1xf32, #tpu.memory_space<vmem>>, vector<32x1xf32>
    %27 = arith.mulf %25, %26 : vector<32x1xf32>
    %28 = vector.broadcast %23 : vector<32x1xf32> to vector<32x48xf32>
    %29 = arith.subf %19, %28 : vector<32x48xf32>
    %30 = math.exp %29 : vector<32x48xf32>
    %cst_10 = arith.constant dense<0.000000e+00> : vector<32xf32>
    %31 = vector.multi_reduction <add>, %30, %cst_10 [1] : vector<32x48xf32> to vector<32xf32>
    %32 = vector.shape_cast %31 : vector<32xf32> to vector<32x1xf32>
    %33 = arith.addf %27, %32 : vector<32x1xf32>
    %c0_11 = arith.constant 0 : index
    %c0_12 = arith.constant 0 : index
    %34 = vector.load %arg7[%c0_11, %c0_12] : memref<32x1xf32, #tpu.memory_space<vmem>>, vector<32x1xf32>
    tpu.vector_store %arg7[%c0_11, %c0_12], %33 {strides = array<i32>} : memref<32x1xf32, #tpu.memory_space<vmem>>, vector<32x1xf32>,
    %c0_13 = arith.constant 0 : index
    %c0_14 = arith.constant 0 : index
    %35 = vector.load %arg6[%c0_13, %c0_14] : memref<32x1xf32, #tpu.memory_space<vmem>>, vector<32x1xf32>
    tpu.vector_store %arg6[%c0_13, %c0_14], %23 {strides = array<i32>} : memref<32x1xf32, #tpu.memory_space<vmem>>, vector<32x1xf32>,
    %c2_i32 = arith.constant 2 : i32
    %36 = arith.cmpi eq, %arg1, %c2_i32 : i32
    %37 = arith.extui %36 : i1 to i32
    %c0_i32_15 = arith.constant 0 : i32
    %38 = arith.cmpi ne, %37, %c0_i32_15 : i32
    scf.if %38 {
      %c0_16 = arith.constant 0 : index
      %c0_17 = arith.constant 0 : index
      %39 = vector.load %arg4[%c0_16, %c0_17] : memref<32x1xf32, #tpu.memory_space<vmem>>, vector<32x1xf32>
      %c0_18 = arith.constant 0 : index
      %c0_19 = arith.constant 0 : index
      %40 = vector.load %arg6[%c0_18, %c0_19] : memref<32x1xf32, #tpu.memory_space<vmem>>, vector<32x1xf32>
      %c0_20 = arith.constant 0 : index
      %c0_21 = arith.constant 0 : index
      %41 = vector.load %arg7[%c0_20, %c0_21] : memref<32x1xf32, #tpu.memory_space<vmem>>, vector<32x1xf32>
      %42 = math.log %41 : vector<32x1xf32>
      %43 = arith.addf %40, %42 : vector<32x1xf32>
      %44 = arith.subf %39, %43 : vector<32x1xf32>
      %c0_22 = arith.constant 0 : index
      %c0_23 = arith.constant 0 : index
      %45 = vector.load %arg5[%c0_22, %c0_23] : memref<32x1xf32, #tpu.memory_space<vmem>>, vector<32x1xf32>
      tpu.vector_store %arg5[%c0_22, %c0_23], %44 {strides = array<i32>} : memref<32x1xf32, #tpu.memory_space<vmem>>, vector<32x1xf32>,
    } else {
    }
    return
  }
  func.func @transform_0(%arg0: i32, %arg1: i32) -> (i32, i32) {
    %c0_i32 = arith.constant 0 : i32
    %c0_i32_0 = arith.constant 0 : i32
    return %arg0, %c0_i32 : i32, i32
  }
  func.func @transform_1(%arg0: i32, %arg1: i32) -> (i32, i32) {
    %c0_i32 = arith.constant 0 : i32
    %c0_i32_0 = arith.constant 0 : i32
    return %arg1, %c0_i32 : i32, i32
  }
  func.func @transform_2(%arg0: i32, %arg1: i32) -> (i32, i32) {
    %c0_i32 = arith.constant 0 : i32
    %c0_i32_0 = arith.constant 0 : i32
    return %arg0, %c0_i32 : i32, i32
  }
  func.func @transform_3(%arg0: i32, %arg1: i32) -> (i32, i32) {
    %c0_i32 = arith.constant 0 : i32
    %c0_i32_0 = arith.constant 0 : i32
    return %arg0, %c0_i32 : i32, i32
  }
}

</mosaic_0001>

<llo_original>
// kernel: tpu_custom_call.1
$region0: #{tpu_custom_call.1}
  #allocation0 [shape = 'u32[]', space=smem, size = 0x4, offset = 0x4, fixed_abs, tag = 'smem constant byte address 0x4 - core index']
  #allocation1 [shape = 'u32[144,128]{1,0:T(1,128)}', space=vmem, size = 0x12000, scoped, tag = 'internal scratch']
  #allocation2 [shape = 'f32[32,1]{1,0:T(8,128)}', space=vmem, size = 0x4000, scoped, tag = 'scratch operand']
  #allocation3 [shape = 'f32[32,1]{1,0:T(8,128)}', space=vmem, size = 0x4000, scoped, tag = 'scratch operand']
  %s0 = inlined_call_operand.vmem [shape: bf16[64,128], index: 0, kind: input, shape index: {}]
  %s1 = inlined_call_operand.hbm [shape: bf16[144,128], index: 1, kind: input, shape index: {}]
  %s2 = inlined_call_operand.vmem [shape: f32[64,1], index: 2, kind: input, shape index: {}]
  %s3 = inlined_call_operand.vmem [shape: f32[64,1], index: 3, kind: output, shape index: {}]
  %s4 = sld [smem:[#allocation0]]
  $region57: #{tpu_custom_call.1} parent=0
    _
  %s6 = ssub.s32 1, %s4
  %s7 = scalar_select 0, %s6, %s4
  $region1: #{tpu_custom_call.1} parent=0
    #allocation4 [shape = 'u8[24576]{0}', space=vmem, size = 0x6000, scoped, tag = 'input window, operand 1']
    #allocation5 [shape = 's32[2]{0}', space=sflag, size = 0x8, scoped, tag = 'scoped memory for tpu_custom_call.1']
    %8 = vsyncpa [#allocation5], 0
    %s9 = scalar_lea.sflag [#allocation5], 1
    %10 = vsyncpa %s9, 0
    loop: start=0, step=1, limit=8
    $region2: #{tpu_custom_call.1} parent=1 // loop_pre_header
      _
    $region3: #{tpu_custom_call.1} parent=1 // loop_header
      %s12 = sphi 0, %s16
      %p13 = scmp.ge.s32.totalorder %s12, 8
      %s19 = sphi 0, %s31
      %s20 = sphi 0, %s27
      %s21 = sphi 0, %s19
      %s22 = sphi 0, %s20
      %s23 = sphi 0, %s21
      %s24 = sphi 0, %s22
      %s34 = sphi 0, %s36
      %s37 = sphi 0, %s34
      %s38 = sphi 0, %s37
      %s54 = sphi 0, %s38
      %s60 = sphi 0, %s62
      %s63 = sphi 0, %s60
      %s64 = sphi 0, %s63
      %s80 = sphi 0, %s64
      %s86 = sphi 0, %s88
      %s89 = sphi 0, %s86
      %s90 = sphi 0, %s89
      %s106 = sphi 0, %s90
      %s112 = sphi 0, %s114
      %s115 = sphi 0, %s112
      %s116 = sphi 0, %s115
      %s132 = sphi 0, %s116
    $region4: #{tpu_custom_call.1} parent=1 // loop_header_branch
      %15 = sbr.rel (%p13) target = $region8
    $region5: #{tpu_custom_call.1} parent=1 // loop_body
      %s17 = ssub.s32 %s12, 1
      %s18 = ssub.s32 %s12, 2
      %s25 = sadd.s32 1, %s20
      %p26 = scmp.ge.s32.totalorder %s25, 3
      %s27 = scalar_select %p26, 0, %s25
      %s28 = sadd.s32 1, %s19
      %s29 = scalar_select %p26, %s28, %s19
      %p30 = scmp.ge.s32.totalorder %s29, 2
      %s31 = scalar_select %p30, 0, %s29
      %s32 = ssub.s32 %s19, %s31
      %p33 = scmp.eq.s32.totalorder %s32, 0
      %s35 = sadd.s32 %s34, 1
      %s36 = scalar_select %p33, %s34, %s35
      %p39 = pneg %p33
      %p40 = scmp.eq.s32.totalorder %s12, 5
      %p41 = por %p39, %p40
      %p42 = scmp.ne.s32.totalorder %s34, %s37
      %p43 = scmp.eq.s32.totalorder %s12, 0
      %p44 = por %p42, %p43
      %p45 = scmp.ne.s32.totalorder %s34, %s37
      %p46 = scmp.eq.s32.totalorder %s17, 5
      %p47 = por %p45, %p46
      %p48 = scmp.ne.s32.totalorder %s37, %s38
      %p49 = scmp.eq.s32.totalorder %s17, 0
      %p50 = por %p48, %p49
      %p51 = scmp.ne.s32.totalorder %s37, %s38
      %p52 = scmp.eq.s32.totalorder %s18, 5
      %p53 = por %p51, %p52
      %p55 = scmp.ne.s32.totalorder %s38, %s54
      %p56 = scmp.eq.s32.totalorder %s18, 0
      %p57 = por %p55, %p56
      %s58 = ssub.s32 %s20, %s27
      %p59 = scmp.eq.s32.totalorder %s58, 0
      %s61 = sadd.s32 %s60, 1
      %s62 = scalar_select %p59, %s60, %s61
      %p65 = pneg %p59
      %p66 = scmp.eq.s32.totalorder %s12, 5
      %p67 = por %p65, %p66
      %p68 = scmp.ne.s32.totalorder %s60, %s63
      %p69 = scmp.eq.s32.totalorder %s12, 0
      %p70 = por %p68, %p69
      %p71 = scmp.ne.s32.totalorder %s60, %s63
      %p72 = scmp.eq.s32.totalorder %s17, 5
      %p73 = por %p71, %p72
      %p74 = scmp.ne.s32.totalorder %s63, %s64
      %p75 = scmp.eq.s32.totalorder %s17, 0
      %p76 = por %p74, %p75
      %p77 = scmp.ne.s32.totalorder %s63, %s64
      %p78 = scmp.eq.s32.totalorder %s18, 5
      %p79 = por %p77, %p78
      %p81 = scmp.ne.s32.totalorder %s64, %s80
      %p82 = scmp.eq.s32.totalorder %s18, 0
      %p83 = por %p81, %p82
      %s84 = ssub.s32 %s19, %s31
      %p85 = scmp.eq.s32.totalorder %s84, 0
      %s87 = sadd.s32 %s86, 1
      %s88 = scalar_select %p85, %s86, %s87
      %p91 = pneg %p85
      %p92 = scmp.eq.s32.totalorder %s12, 5
      %p93 = por %p91, %p92
      %p94 = scmp.ne.s32.totalorder %s86, %s89
      %p95 = scmp.eq.s32.totalorder %s12, 0
      %p96 = por %p94, %p95
      %p97 = scmp.ne.s32.totalorder %s86, %s89
      %p98 = scmp.eq.s32.totalorder %s17, 5
      %p99 = por %p97, %p98
      %p100 = scmp.ne.s32.totalorder %s89, %s90
      %p101 = scmp.eq.s32.totalorder %s17, 0
      %p102 = por %p100, %p101
      %p103 = scmp.ne.s32.totalorder %s89, %s90
      %p104 = scmp.eq.s32.totalorder %s18, 5
      %p105 = por %p103, %p104
      %p107 = scmp.ne.s32.totalorder %s90, %s106
      %p108 = scmp.eq.s32.totalorder %s18, 0
      %p109 = por %p107, %p108
      %s110 = ssub.s32 %s19, %s31
      %p111 = scmp.eq.s32.totalorder %s110, 0
      %s113 = sadd.s32 %s112, 1
      %s114 = scalar_select %p111, %s112, %s113
      %p117 = pneg %p111
      %p118 = scmp.eq.s32.totalorder %s12, 5
      %p119 = por %p117, %p118
      %p120 = scmp.ne.s32.totalorder %s112, %s115
      %p121 = scmp.eq.s32.totalorder %s12, 0
      %p122 = por %p120, %p121
      %p123 = scmp.ne.s32.totalorder %s112, %s115
      %p124 = scmp.eq.s32.totalorder %s17, 5
      %p125 = por %p123, %p124
      %p126 = scmp.ne.s32.totalorder %s115, %s116
      %p127 = scmp.eq.s32.totalorder %s17, 0
      %p128 = por %p126, %p127
      %p129 = scmp.ne.s32.totalorder %s115, %s116
      %p130 = scmp.eq.s32.totalorder %s18, 5
      %p131 = por %p129, %p130
      %p133 = scmp.ne.s32.totalorder %s116, %s132
      %p134 = scmp.eq.s32.totalorder %s18, 0
      %p135 = por %p133, %p134
      %p136 = scmp.le.s32.totalorder 1, %s12
      %p137 = scmp.lt.s32.totalorder %s12, 7
      %p138 = pnand %p136, %p137
      %p139 = pneg %p138
      // Predicated region
      $region9: #{tpu_custom_call.1} parent=5 // pred_check
        _
      $region10: #{tpu_custom_call.1} parent=5 // pred_check_branch
        %141 = sbr.rel (%p138) target = $region12
      $region11: #{tpu_custom_call.1} parent=5 // pred_region
        %s142 = ssub.s32 %s12, 1
      $region12: #{tpu_custom_call.1} parent=5 // pred_fallthru
        _
      %p143 = scmp.lt.s32.totalorder %s12, 6
      // Predicated region
      $region13: #{tpu_custom_call.1} parent=5 // pred_check
        %p144 = pneg %p143
      $region14: #{tpu_custom_call.1} parent=5 // pred_check_branch
        %146 = sbr.rel (%p144) target = $region16
      $region15: #{tpu_custom_call.1} parent=5 // pred_region
        // Predicated region
        $region17: #{tpu_custom_call.1} parent=15 // pred_check
          %p147 = pneg %p44
        $region18: #{tpu_custom_call.1} parent=15 // pred_check_branch
          %149 = sbr.rel (%p147) target = $region20
        $region19: #{tpu_custom_call.1} parent=15 // pred_region
          %s150 = smul.u32 4, %s19
          %p151 = scmp.lt.s32.totalorder %s150, 7
          %s152 = scalar_select %p151, %s150, 7
          %s153 = smul.addr %s152, 4
          %s154 = scalar_lea.vmem %s0, %s153
          %s155 = smul.u32 4, %s19
        $region20: #{tpu_custom_call.1} parent=15 // pred_fallthru
          _
        // Predicated region
        $region21: #{tpu_custom_call.1} parent=15 // pred_check
          %p156 = pneg %p70
        $region22: #{tpu_custom_call.1} parent=15 // pred_check_branch
          %158 = sbr.rel (%p156) target = $region24
        $region23: #{tpu_custom_call.1} parent=15 // pred_region
          %s159 = sand.u32 %s60, 1
          %s160 = scalar_lea.sflag [#allocation5], %s159
          %s161 = sand.u32 %s60, 1
          %s162 = smul.addr %s161, 24
          %s163 = scalar_lea.vmem [#allocation4], %s162
          %s164 = smul.u32 6, %s20
          %s166 = ssub.s32 384, 384
          %167 = vsyncadd %s160, %s166
          %s168 = smul.addr %s164, 64
          %s169 = scalar_lea.hbm %s1, %s168
          %s170 = sshll.u32 %s163, 4
          %s171 = int_to_ptr.vmem [resolvable:$true] %s170
          %176 = dma.hbm_to_vmem [thread:$0]  %s169, 384, %s171, %s160, 64, 64, 4
        $region24: #{tpu_custom_call.1} parent=15 // pred_fallthru
          _
        // Predicated region
        $region25: #{tpu_custom_call.1} parent=15 // pred_check
          %p177 = pneg %p96
        $region26: #{tpu_custom_call.1} parent=15 // pred_check_branch
          %179 = sbr.rel (%p177) target = $region28
        $region27: #{tpu_custom_call.1} parent=15 // pred_region
          %s180 = smul.u32 4, %s19
          %p181 = scmp.lt.s32.totalorder %s180, 7
          %s182 = scalar_select %p181, %s180, 7
          %s183 = smul.addr %s182, 8
          %s184 = scalar_lea.vmem %s2, %s183
          %s185 = smul.u32 4, %s19
        $region28: #{tpu_custom_call.1} parent=15 // pred_fallthru
          _
      $region16: #{tpu_custom_call.1} parent=5 // pred_fallthru
        _
      %p186 = scmp.le.s32.totalorder 1, %s12
      %p187 = scmp.lt.s32.totalorder %s12, 7
      %p188 = pnand %p186, %p187
      %p189 = pneg %p188
      // Predicated region
      $region29: #{tpu_custom_call.1} parent=5 // pred_check
        _
      $region30: #{tpu_custom_call.1} parent=5 // pred_check_branch
        %191 = sbr.rel (%p188) target = $region32
      $region31: #{tpu_custom_call.1} parent=5 // pred_region
        %s192 = ssub.s32 %s12, 1
        %s193 = sand.u32 %s63, 1
        %s194 = scalar_lea.sflag [#allocation5], %s193
        %s195 = sand.u32 %s63, 1
        %s196 = smul.addr %s195, 24
        %s197 = scalar_lea.vmem [#allocation4], %s196
        // Predicated region
        $region33: #{tpu_custom_call.1} parent=31 // pred_check
          %p198 = pneg %p76
        $region34: #{tpu_custom_call.1} parent=31 // pred_check_branch
          %200 = sbr.rel (%p198) target = $region36
        $region35: #{tpu_custom_call.1} parent=31 // pred_region
          %201 = dma.done %s194, 384
        $region36: #{tpu_custom_call.1} parent=31 // pred_fallthru
          _
        %s202 = smul.u32 4, %s21
        %p203 = scmp.lt.s32.totalorder %s202, 7
        %s204 = scalar_select %p203, %s202, 7
        %s205 = smul.addr %s204, 4
        %s206 = scalar_lea.vmem %s0, %s205
        %p207 = pneg %p50
        %p208 = pneg %p47
        %s209 = sand.u32 %s63, 1
        %s210 = scalar_lea.sflag [#allocation5], %s209
        %s211 = sand.u32 %s63, 1
        %s212 = smul.addr %s211, 24
        %s213 = scalar_lea.vmem [#allocation4], %s212
        %p214 = pneg %p76
        %p215 = pneg %p73
        %s216 = smul.u32 4, %s21
        %p217 = scmp.lt.s32.totalorder %s216, 7
        %s218 = scalar_select %p217, %s216, 7
        %s219 = smul.addr %s218, 8
        %s220 = scalar_lea.vmem %s2, %s219
        %p221 = pneg %p102
        %p222 = pneg %p99
        %p223 = pneg %p128
        %p224 = pneg %p125
        %s225 = smul.u32 4, %s21
        %p226 = scmp.lt.s32.totalorder %s225, 7
        %s227 = scalar_select %p226, %s225, 7
        %s228 = smul.addr %s227, 8
        %s229 = scalar_lea.vmem %s3, %s228
        %s230 = smul.u32 4, %s21
        %p231 = scmp.lt.s32.totalorder %s230, 7
        %s232 = scalar_select %p231, %s230, 7
        %s233 = smul.addr %s232, 4
        %s234 = scalar_lea.vmem %s0, %s233
        %s235 = smul.u32 4, %s21
        %s236 = smul.u32 6, %s22
        %s237 = smul.u32 4, %s21
        %p238 = scmp.lt.s32.totalorder %s237, 7
        %s239 = scalar_select %p238, %s237, 7
        %s240 = smul.addr %s239, 8
        %s241 = scalar_lea.vmem %s2, %s240
        %s242 = smul.u32 4, %s21
        %s243 = smul.u32 4, %s21
        %p244 = scmp.lt.s32.totalorder %s243, 7
        %s245 = scalar_select %p244, %s243, 7
        %s246 = smul.addr %s245, 8
        %s247 = scalar_lea.vmem %s3, %s246
        %s248 = smul.u32 4, %s21
        %p250 = scmp.eq.s32.totalorder %s22, 0
        // Predicated region
        $region37: #{tpu_custom_call.1} parent=31 // pred_check
          %p251 = pneg %p250
        $region38: #{tpu_custom_call.1} parent=31 // pred_check_branch
          %253 = sbr.rel (%p251) target = $region40
        $region39: #{tpu_custom_call.1} parent=31 // pred_region
          %vm254 = vcmask 7168
          %255 = vst.msk [vmem:[#allocation2] sm:$0xff] %vm254, -1e+30
          %256 = vst.msk [vmem:[#allocation2 + $0x8] sm:$0xff] %vm254, -1e+30
          %257 = vst.msk [vmem:[#allocation2 + $0x10] sm:$0xff] %vm254, -1e+30
          %258 = vst.msk [vmem:[#allocation2 + $0x18] sm:$0xff] %vm254, -1e+30
          %259 = vst.msk [vmem:[#allocation3] sm:$0xff] %vm254, 0.0
          %260 = vst.msk [vmem:[#allocation3 + $0x8] sm:$0xff] %vm254, 0.0
          %261 = vst.msk [vmem:[#allocation3 + $0x10] sm:$0xff] %vm254, 0.0
          %262 = vst.msk [vmem:[#allocation3 + $0x18] sm:$0xff] %vm254, 0.0
        $region40: #{tpu_custom_call.1} parent=31 // pred_fallthru
          _
        %v263 = vld [vmem:[%s234] sm:$0xf]
        %v264 = vld [vmem:[%s234 + $0x4] sm:$0xf]
        %v265 = vld [vmem:[%s234 + $0x8] sm:$0xf]
        %v266 = vld [vmem:[%s234 + $0xc] sm:$0xf]
        %v267 = vld [vmem:[%s197] sm:$0xf]
        %v268 = vld [vmem:[%s197 + $0x4] sm:$0xf]
        %v269 = vld [vmem:[%s197 + $0x8] sm:$0xf]
        %v270 = vld [vmem:[%s197 + $0xc] sm:$0xf]
        %v271 = vld [vmem:[%s197 + $0x10] sm:$0xf]
        %v272 = vld [vmem:[%s197 + $0x14] sm:$0xf]
        %v277 = vunpack.c.l.b16 %v263
        %v278 = vunpack.c.l.b16 %v264
        %v279 = vunpack.c.l.b16 %v265
        %v280 = vunpack.c.l.b16 %v266
        %v281 = vpack.c.b16 %v278, %v277
        %v282 = vpack.c.b16 %v280, %v279
        %v291 = vunpack.c.l.b16 %v267
        %v292 = vunpack.c.l.b16 %v268
        %v293 = vunpack.c.l.b16 %v269
        %v294 = vunpack.c.l.b16 %v270
        %v295 = vunpack.c.l.b16 %v271
        %v296 = vunpack.c.l.b16 %v272
        %v297 = vpack.c.b16 %v292, %v291
        %v298 = vpack.c.b16 %v294, %v293
        %v299 = vpack.c.b16 %v296, %v295
        %303 = vmatprep.subr.bf16.mxu0 0
        %304 = vmatpush1.bf16.xpose.msra.mxu0 %v297
        %305 = vmatprep.subr.bf16.mxu0 0
        %306 = vmatpush1.bf16.xpose.msra.mxu0 %v298
        %307 = vmatprep.subr.bf16.mxu0 0
        %308 = vmatpush1.bf16.xpose.msra.mxu0 %v299
        %309 = vmatprep.subr.bf16.mxu0 0
        %310 = vmatpush1.bf16.xpose.msra.mxu0 0
        %311 = vmatprep.subr.bf16.mxu0 0
        %312 = vmatpush1.bf16.xpose.msra.mxu0 0
        %313 = vmatprep.subr.bf16.mxu0 0
        %314 = vmatpush1.bf16.xpose.msra.mxu0 0
        %315 = vmatprep.subr.bf16.mxu0 0
        %316 = vmatpush1.bf16.xpose.msra.mxu0 0
        %317 = vmatprep.subr.bf16.mxu0 0
        %318 = vmatpush1.bf16.xpose.msra.mxu0 0
        %319 = vmatprep.subr.bf16.mxu0 0
        %320 = vmatpush1.bf16.xpose.msra.mxu0 0
        %321 = vmatprep.subr.bf16.mxu0 0
        %322 = vmatpush1.bf16.xpose.msra.mxu0 0
        %323 = vmatprep.subr.bf16.mxu0 0
        %324 = vmatpush1.bf16.xpose.msra.mxu0 0
        %325 = vmatprep.subr.bf16.mxu0 0
        %326 = vmatpush1.bf16.xpose.msra.mxu0 0
        %327 = vmatprep.subr.bf16.mxu0 0
        %328 = vmatpush1.bf16.xpose.msra.mxu0 0
        %329 = vmatprep.subr.bf16.mxu0 0
        %330 = vmatpush1.bf16.xpose.msra.mxu0 0
        %331 = vmatprep.subr.bf16.mxu0 0
        %332 = vmatpush1.bf16.xpose.msra.mxu0 0
        %333 = vmatprep.subr.bf16.mxu0 0
        %334 = vmatpush1.bf16.xpose.msra.mxu0 0
        %335 = vmatprep.mubr.bf16.mxu0 0
        %336 = vmatmul.mubr.bf16.gmra.mrb[0].mxu0 %v281
        %v337 = vpop.f32.mrb[0].mxu0
        %v338 = vadd.f32 0.0, %v337
        %v339 = vpop.f32.mrb[0].mxu0
        %v340 = vpop.f32.mrb[0].mxu0
        %v341 = vadd.f32 0.0, %v340
        %v342 = vpop.f32.mrb[0].mxu0
        %343 = vmatprep.mubr.bf16.mxu0 0
        %344 = vmatmul.mubr.bf16.gmra.mrb[0].mxu0 %v282
        %v345 = vpop.f32.mrb[0].mxu0
        %v346 = vadd.f32 0.0, %v345
        %v347 = vpop.f32.mrb[0].mxu0
        %v348 = vpop.f32.mrb[0].mxu0
        %v349 = vadd.f32 0.0, %v348
        %v350 = vpop.f32.mrb[0].mxu0
        %351 = vdwg.mxu0
        %s352 = smul.u32 %s21, 32
        %v353 = vlaneseq
        %v354 = vshrl.u32 %v353, 7
        %v355 = vadd.s32 %v354, 8
        %v356 = vadd.s32 %v354, 16
        %v357 = vadd.s32 %v354, 24
        %v358 = vstv %s352
        %v359 = vadd.s32 %v358, %v354
        %v360 = vadd.s32 %v358, %v355
        %v361 = vadd.s32 %v358, %v356
        %v362 = vadd.s32 %v358, %v357
        %s363 = smul.u32 %s22, 48
        %v364 = vlaneseq
        %v365 = vand.u32 %v364, 127
        %v366 = vstv %s363
        %v367 = vadd.s32 %v366, %v365
        %vm368 = vcmp.eq.s32.totalorder %v359, %v367
        %vm369 = vcmp.eq.s32.totalorder %v360, %v367
        %vm370 = vcmp.eq.s32.totalorder %v361, %v367
        %vm371 = vcmp.eq.s32.totalorder %v362, %v367
        %vm372 = vcmp.ge.s32.totalorder %v367, 128
        %vm373 = vmor %vm368, %vm372
        %vm374 = vmor %vm369, %vm372
        %vm375 = vmor %vm370, %vm372
        %vm376 = vmor %vm371, %vm372
        %v377 = vsel %vm373, -1e+30, %v338
        %v378 = vsel %vm374, -1e+30, %v341
        %v379 = vsel %vm375, -1e+30, %v346
        %v380 = vsel %vm376, -1e+30, %v349
        %v381 = vld [vmem:[#allocation2] sm:$0xff]
        %v382 = vld [vmem:[#allocation2 + $0x8] sm:$0xff]
        %v383 = vld [vmem:[#allocation2 + $0x10] sm:$0xff]
        %v384 = vld [vmem:[#allocation2 + $0x18] sm:$0xff]
        %vm385 = vcmask 392192
        %v386 = vsel %vm385, %v377, -inf
        %387 = vmax.xlane.f32.xlu0 %v386
        %v388 = vpop.xlane.xlu0 %387
        %v389 = vsel %vm385, %v378, -inf
        %390 = vmax.xlane.f32.xlu0 %v389
        %v391 = vpop.xlane.xlu0 %390
        %v392 = vsel %vm385, %v379, -inf
        %393 = vmax.xlane.f32.xlu0 %v392
        %v394 = vpop.xlane.xlu0 %393
        %v395 = vsel %vm385, %v380, -inf
        %396 = vmax.xlane.f32.xlu0 %v395
        %v397 = vpop.xlane.xlu0 %396
        %v398 = vmax.f32 %v381, %v388
        %v399 = vmax.f32 %v382, %v391
        %v400 = vmax.f32 %v383, %v394
        %v401 = vmax.f32 %v384, %v397
        %v402 = vsub.f32 %v381, %v398
        %v403 = vsub.f32 %v382, %v399
        %v404 = vsub.f32 %v383, %v400
        %v405 = vsub.f32 %v384, %v401
        %v406 = vmul.f32 %v402, 1.442695
        %v407 = vpow.pop %v406
        %v408 = vmul.f32 %v403, 1.442695
        %v409 = vpow.pop %v408
        %v410 = vmul.f32 %v404, 1.442695
        %v411 = vpow.pop %v410
        %v412 = vmul.f32 %v405, 1.442695
        %v413 = vpow.pop %v412
        %v414 = vld [vmem:[#allocation3] sm:$0xff]
        %v415 = vld [vmem:[#allocation3 + $0x8] sm:$0xff]
        %v416 = vld [vmem:[#allocation3 + $0x10] sm:$0xff]
        %v417 = vld [vmem:[#allocation3 + $0x18] sm:$0xff]
        %v418 = vmul.f32 %v407, %v414
        %v419 = vmul.f32 %v409, %v415
        %v420 = vmul.f32 %v411, %v416
        %v421 = vmul.f32 %v413, %v417
        %423 = vset.pattern.permute.xlu0 0
        %424 = vperm.xlu0 %423, %v398
        %v425 = vpop.permute.xlu0 %424
        %428 = vset.pattern.permute.xlu0 0
        %429 = vperm.xlu0 %428, %v399
        %v430 = vpop.permute.xlu0 %429
        %433 = vset.pattern.permute.xlu0 0
        %434 = vperm.xlu0 %433, %v400
        %v435 = vpop.permute.xlu0 %434
        %438 = vset.pattern.permute.xlu0 0
        %439 = vperm.xlu0 %438, %v401
        %v440 = vpop.permute.xlu0 %439
        %v442 = vsub.f32 %v377, %v425
        %v443 = vsub.f32 %v378, %v430
        %v444 = vsub.f32 %v379, %v435
        %v445 = vsub.f32 %v380, %v440
        %v446 = vmul.f32 %v442, 1.442695
        %v447 = vpow.pop %v446
        %v448 = vmul.f32 %v443, 1.442695
        %v449 = vpow.pop %v448
        %v450 = vmul.f32 %v444, 1.442695
        %v451 = vpow.pop %v450
        %v452 = vmul.f32 %v445, 1.442695
        %v453 = vpow.pop %v452
        %v454 = vsel %vm385, %v447, 0.0
        %455 = vadd.xlane.f32.xlu0 %v454
        %v456 = vpop.xlane.xlu0 %455
        %v457 = vsel %vm385, %v449, 0.0
        %458 = vadd.xlane.f32.xlu0 %v457
        %v459 = vpop.xlane.xlu0 %458
        %v460 = vsel %vm385, %v451, 0.0
        %461 = vadd.xlane.f32.xlu0 %v460
        %v462 = vpop.xlane.xlu0 %461
        %v463 = vsel %vm385, %v453, 0.0
        %464 = vadd.xlane.f32.xlu0 %v463
        %v465 = vpop.xlane.xlu0 %464
        %v466 = vadd.f32 %v418, %v456
        %v467 = vadd.f32 %v419, %v459
        %v468 = vadd.f32 %v420, %v462
        %v469 = vadd.f32 %v421, %v465
        %vm470 = vcmask 7168
        %471 = vst.msk [vmem:[#allocation3] sm:$0xff] %vm470, %v466
        %472 = vst.msk [vmem:[#allocation3 + $0x8] sm:$0xff] %vm470, %v467
        %473 = vst.msk [vmem:[#allocation3 + $0x10] sm:$0xff] %vm470, %v468
        %474 = vst.msk [vmem:[#allocation3 + $0x18] sm:$0xff] %vm470, %v469
        %475 = vst.msk [vmem:[#allocation2] sm:$0xff] %vm470, %v398
        %476 = vst.msk [vmem:[#allocation2 + $0x8] sm:$0xff] %vm470, %v399
        %477 = vst.msk [vmem:[#allocation2 + $0x10] sm:$0xff] %vm470, %v400
        %478 = vst.msk [vmem:[#allocation2 + $0x18] sm:$0xff] %vm470, %v401
        %p479 = scmp.eq.s32.totalorder %s22, 2
        // Predicated region
        $region41: #{tpu_custom_call.1} parent=31 // pred_check
          %p480 = pneg %p479
        $region42: #{tpu_custom_call.1} parent=31 // pred_check_branch
          %482 = sbr.rel (%p480) target = $region44
        $region43: #{tpu_custom_call.1} parent=31 // pred_region
          %v483 = vld [vmem:[%s241] sm:$0xff]
          %v484 = vld [vmem:[%s241 + $0x8] sm:$0xff]
          %v485 = vld [vmem:[%s241 + $0x10] sm:$0xff]
          %v486 = vld [vmem:[%s241 + $0x18] sm:$0xff]
          %v487 = vld [vmem:[#allocation2] sm:$0xff]
          %v488 = vld [vmem:[#allocation2 + $0x8] sm:$0xff]
          %v489 = vld [vmem:[#allocation2 + $0x10] sm:$0xff]
          %v490 = vld [vmem:[#allocation2 + $0x18] sm:$0xff]
          %v491 = vld [vmem:[#allocation3] sm:$0xff]
          %v492 = vld [vmem:[#allocation3 + $0x8] sm:$0xff]
          %v493 = vld [vmem:[#allocation3 + $0x10] sm:$0xff]
          %v494 = vld [vmem:[#allocation3 + $0x18] sm:$0xff]
          %v495 = vlog2.pop %v491
          %v496 = vmul.f32 %v495, 0.6931472
          %v497 = vlog2.pop %v492
          %v498 = vmul.f32 %v497, 0.6931472
          %v499 = vlog2.pop %v493
          %v500 = vmul.f32 %v499, 0.6931472
          %v501 = vlog2.pop %v494
          %v502 = vmul.f32 %v501, 0.6931472
          %v503 = vadd.f32 %v487, %v496
          %v504 = vadd.f32 %v488, %v498
          %v505 = vadd.f32 %v489, %v500
          %v506 = vadd.f32 %v490, %v502
          %v507 = vsub.f32 %v483, %v503
          %v508 = vsub.f32 %v484, %v504
          %v509 = vsub.f32 %v485, %v505
          %v510 = vsub.f32 %v486, %v506
          %511 = vst.msk [vmem:[%s247] sm:$0xff] %vm470, %v507
          %512 = vst.msk [vmem:[%s247 + $0x8] sm:$0xff] %vm470, %v508
          %513 = vst.msk [vmem:[%s247 + $0x10] sm:$0xff] %vm470, %v509
          %514 = vst.msk [vmem:[%s247 + $0x18] sm:$0xff] %vm470, %v510
        $region44: #{tpu_custom_call.1} parent=31 // pred_fallthru
          _
        %s515 = smul.u32 4, %s21
        %p516 = scmp.lt.s32.totalorder %s515, 7
        %s517 = scalar_select %p516, %s515, 7
        %s518 = smul.addr %s517, 8
        %s519 = scalar_lea.vmem %s3, %s518
        // Predicated region
        $region45: #{tpu_custom_call.1} parent=31 // pred_check
          %p520 = pneg %p125
        $region46: #{tpu_custom_call.1} parent=31 // pred_check_branch
          %522 = sbr.rel (%p520) target = $region48
        $region47: #{tpu_custom_call.1} parent=31 // pred_region
          %s523 = smul.u32 4, %s21
        $region48: #{tpu_custom_call.1} parent=31 // pred_fallthru
          _
      $region32: #{tpu_custom_call.1} parent=5 // pred_fallthru
        _
      %p524 = scmp.le.s32.totalorder 2, %s12
      // Predicated region
      $region49: #{tpu_custom_call.1} parent=5 // pred_check
        %p525 = pneg %p524
      $region50: #{tpu_custom_call.1} parent=5 // pred_check_branch
        %527 = sbr.rel (%p525) target = $region52
      $region51: #{tpu_custom_call.1} parent=5 // pred_region
        %s528 = ssub.s32 %s12, 2
        // Predicated region
        $region53: #{tpu_custom_call.1} parent=51 // pred_check
          %p529 = pneg %p131
        $region54: #{tpu_custom_call.1} parent=51 // pred_check_branch
          %531 = sbr.rel (%p529) target = $region56
        $region55: #{tpu_custom_call.1} parent=51 // pred_region
          %s532 = smul.u32 4, %s23
          %p533 = scmp.lt.s32.totalorder %s532, 7
          %s534 = scalar_select %p533, %s532, 7
          %s535 = smul.addr %s534, 8
          %s536 = scalar_lea.vmem %s3, %s535
        $region56: #{tpu_custom_call.1} parent=51 // pred_fallthru
          _
      $region52: #{tpu_custom_call.1} parent=5 // pred_fallthru
        _
    $region6: #{tpu_custom_call.1} parent=1 // loop_footer
      %s16 = sadd.s32 1, %s12
    $region7: #{tpu_custom_call.1} parent=1 // loop_footer_branch
      %11 = sbr.rel target = $region3
    $region8: #{tpu_custom_call.1} parent=1 // loop_exit
      _
    %537 = vsyncpa [#allocation5], 1
    %s538 = scalar_lea.sflag [#allocation5], 1
    %539 = vsyncpa %s538, 1

</llo_original>
